<compile_context>
chip_gen: v6e
topology: v6e:2x2x1
jax: 0.10.0
libtpu: 0.0.40
codegen_flags: <defaults>
</compile_context>

<pallas_src>
import functools
import math

import jax
import jax.numpy as jnp
from jax import lax
from jax.experimental import pallas as pl
from jax.experimental.pallas import tpu as pltpu


# ---------------------------------------------------------------------------
# Per-generation defaults
# ---------------------------------------------------------------------------

@functools.lru_cache(maxsize=1)
def _chip_defaults():
    kind = ""
    try:
        kind = jax.devices()[0].device_kind.lower()
    except Exception:
        pass
    if "v7" in kind:
        # 64 MiB physical VMEM, 2 TensorCores -> tighter scoped limit.
        return {"vmem": 48 * 1024 * 1024, "tm": 256, "tn": 256, "tk": 512}
    if "v6" in kind or "v5e" in kind or "v5 lite" in kind or "v5litepod" in kind:
        # 128 MiB physical VMEM -> big tiles reach ~85% of HBM roofline.
        return {"vmem": 96 * 1024 * 1024, "tm": 512, "tn": 512, "tk": 512}
    # Unknown / older chips: conservative.
    return {"vmem": 32 * 1024 * 1024, "tm": 256, "tn": 256, "tk": 512}


def _pick_tile(dim, target, mults):
    """Largest tile <= target that divides dim, preferring coarser alignments.

    Falls back to the full dim (always a legal block: block == array extent).
    """
    if dim <= target:
        return dim
    for mult in mults:
        t = (target // mult) * mult
        while t >= mult:
            if dim % t == 0:
                return t
            t -= mult
    return dim


# ---------------------------------------------------------------------------
# Tiled matmul (+ bias) kernels
# ---------------------------------------------------------------------------

def _matmul_kernel(x_ref, w_ref, o_ref, acc_ref):
    @pl.when(pl.program_id(2) == 0)
    def _():
        acc_ref[...] = jnp.zeros_like(acc_ref)

    acc_ref[...] += jnp.dot(x_ref[...], w_ref[...],
                            preferred_element_type=jnp.float32)

    @pl.when(pl.program_id(2) == pl.num_programs(2) - 1)
    def _():
        o_ref[...] = acc_ref[...].astype(o_ref.dtype)


def _matmul_bias_kernel(x_ref, w_ref, b_ref, o_ref, acc_ref):
    @pl.when(pl.program_id(2) == 0)
    def _():
        acc_ref[...] = jnp.zeros_like(acc_ref)

    acc_ref[...] += jnp.dot(x_ref[...], w_ref[...],
                            preferred_element_type=jnp.float32)

    @pl.when(pl.program_id(2) == pl.num_programs(2) - 1)
    def _():
        o_ref[...] = (acc_ref[...] + b_ref[...].astype(jnp.float32)
                      ).astype(o_ref.dtype)


def pallas_linear(x2d, w, b=None, *, out_dtype=jnp.float32):
    """x2d: (M, K), w: (K, N), optional bias b: (N,). Returns (M, N).

    Operands are expected to already be in the desired compute dtype
    (pre-cast once in the wrapper, not per tile inside the kernel).
    """
    M, K = x2d.shape
    K2, N = w.shape
    assert K == K2
    d = _chip_defaults()
    tm = _pick_tile(M, d["tm"], (256, 128, 8))   # MXU-friendly M tiles
    tn = _pick_tile(N, d["tn"], (256, 128))      # lane-dense N tiles
    tk = _pick_tile(K, d["tk"], (256, 128))
    grid = (M // tm, N // tn, K // tk)

    cost = pl.CostEstimate(
        flops=int(2 * M * N * K),
        transcendentals=0,
        bytes_accessed=int(M * K * x2d.dtype.itemsize
                           + K * N * w.dtype.itemsize
                           + M * N * jnp.dtype(out_dtype).itemsize))
    cparams = pltpu.CompilerParams(
        dimension_semantics=("parallel", "parallel", "arbitrary"),
        vmem_limit_bytes=d["vmem"])
    scratch = [pltpu.VMEM((tm, tn), jnp.float32)]

    if b is None:
        kern = _matmul_kernel
        in_specs = [pl.BlockSpec((tm, tk), lambda i, j, kk: (i, kk)),
                    pl.BlockSpec((tk, tn), lambda i, j, kk: (kk, j))]
        operands = (x2d, w)
    else:
        kern = _matmul_bias_kernel
        b2d = b.reshape(1, N)
        in_specs = [pl.BlockSpec((tm, tk), lambda i, j, kk: (i, kk)),
                    pl.BlockSpec((tk, tn), lambda i, j, kk: (kk, j)),
                    pl.BlockSpec((1, tn), lambda i, j, kk: (0, j))]
        operands = (x2d, w, b2d)

    return pl.pallas_call(
        kern,
        out_shape=jax.ShapeDtypeStruct((M, N), out_dtype),
        grid_spec=pltpu.PrefetchScalarGridSpec(
            num_scalar_prefetch=0,
            grid=grid,
            in_specs=in_specs,
            out_specs=pl.BlockSpec((tm, tn), lambda i, j, kk: (i, j)),
            scratch_shapes=scratch),
        compiler_params=cparams,
        cost_estimate=cost,
    )(*operands)


# ---------------------------------------------------------------------------
# Flash-style attention: grid = (batch*heads, q_tiles, kv_tiles)
# ---------------------------------------------------------------------------

def _flash_attn_kernel(q_ref, k_ref, v_ref, o_ref, m_sc, l_sc, acc_sc, *,
                       compute_dtype, approx_recip):
    ki = pl.program_id(2)

    @pl.when(ki == 0)
    def _():
        m_sc[...] = jnp.full_like(m_sc, -jnp.inf)
        l_sc[...] = jnp.zeros_like(l_sc)
        acc_sc[...] = jnp.zeros_like(acc_sc)

    # 1/sqrt(dk) is already folded into Wq, so q arrives pre-scaled.
    q = q_ref[0, 0]                                   # (tq, dk)
    k = k_ref[0, 0]                                   # (tkv, dk)
    v = v_ref[0, 0]                                   # (tkv, dk)

    # scores = q @ k^T -- contract last dims, no materialized transpose.
    s = lax.dot_general(q, k, (((1,), (1,)), ((), ())),
                        preferred_element_type=jnp.float32)      # (tq, tkv) f32

    m_prev = m_sc[...]
    m_new = jnp.maximum(m_prev, jnp.max(s, axis=-1, keepdims=True))
    alpha = jnp.exp(m_prev - m_new)
    p = jnp.exp(s - m_new)
    l_sc[...] = alpha * l_sc[...] + jnp.sum(p, axis=-1, keepdims=True)
    acc_sc[...] = alpha * acc_sc[...] + jnp.dot(
        p.astype(compute_dtype), v, preferred_element_type=jnp.float32)
    m_sc[...] = m_new

    @pl.when(ki == pl.num_programs(2) - 1)
    def _():
        # Normalize AFTER the PV matmul (tq*dk elements, not tq*tkv).
        if approx_recip:
            inv_l = pl.reciprocal(l_sc[...], approx=True)   # EUP slot
        else:
            inv_l = 1.0 / l_sc[...]                          # exact, f32 path
        o_ref[0] = (acc_sc[...] * inv_l).astype(o_ref.dtype)


def pallas_flash_attention(qkv5, *, compute_dtype, tq_target=256,
                           tkv_target=512):
    """qkv5: (3, b*heads, t, dk) with Q pre-scaled. Returns (b*heads, t, dk)."""
    three, bh, t, dk = qkv5.shape
    assert three == 3
    tq = _pick_tile(t, tq_target, (128, 8))
    tkv = _pick_tile(t, tkv_target, (128, 8))
    nq = t // tq
    nkv = t // tkv
    approx = jnp.dtype(compute_dtype) == jnp.dtype(jnp.bfloat16)
    d = _chip_defaults()

    kern = functools.partial(_flash_attn_kernel, compute_dtype=compute_dtype,
                             approx_recip=approx)
    cost = pl.CostEstimate(
        flops=int(4 * bh * t * t * dk),
        transcendentals=int(bh * t * t),
        bytes_accessed=int(3 * bh * t * dk * qkv5.dtype.itemsize
                           + bh * t * dk * jnp.dtype(compute_dtype).itemsize))
    cparams = pltpu.CompilerParams(
        dimension_semantics=("parallel", "parallel", "arbitrary"),
        vmem_limit_bytes=d["vmem"])

    return pl.pallas_call(
        kern,
        out_shape=jax.ShapeDtypeStruct((bh, t, dk), compute_dtype),
        grid_spec=pltpu.PrefetchScalarGridSpec(
            num_scalar_prefetch=0,
            grid=(bh, nq, nkv),
            in_specs=[
                # Head/batch and Q/K/V selection happens in the index_map (DMA),
                # not via lane slices inside the kernel.
                pl.BlockSpec((1, 1, tq, dk), lambda b_, qi, ki: (0, b_, qi, 0)),
                pl.BlockSpec((1, 1, tkv, dk), lambda b_, qi, ki: (1, b_, ki, 0)),
                pl.BlockSpec((1, 1, tkv, dk), lambda b_, qi, ki: (2, b_, ki, 0)),
            ],
            out_specs=pl.BlockSpec((1, tq, dk), lambda b_, qi, ki: (b_, qi, 0)),
            scratch_shapes=[
                pltpu.VMEM((tq, 1), jnp.float32),    # running max m
                pltpu.VMEM((tq, 1), jnp.float32),    # running sum l
                pltpu.VMEM((tq, dk), jnp.float32),   # output accumulator
            ]),
        compiler_params=cparams,
        cost_estimate=cost,
    )(qkv5, qkv5, qkv5)


# ---------------------------------------------------------------------------
# Parameters & forward (matching the PyTorch module semantics)
# ---------------------------------------------------------------------------

def init_params(key, k, heads):
    """PyTorch nn.Linear-style init: U(-1/sqrt(fan_in), 1/sqrt(fan_in))."""
    kq, kk, kv, ku, kub = jax.random.split(key, 5)
    lim_in = 1.0 / math.sqrt(k)
    lim_out = 1.0 / math.sqrt(k * heads)
    # weights stored transposed vs PyTorch: (in_features, out_features)
    return {
        "wq": jax.random.uniform(kq, (k, k * heads), jnp.float32, -lim_in, lim_in),
        "wk": jax.random.uniform(kk, (k, k * heads), jnp.float32, -lim_in, lim_in),
        "wv": jax.random.uniform(kv, (k, k * heads), jnp.float32, -lim_in, lim_in),
        "wu": jax.random.uniform(ku, (k * heads, k), jnp.float32, -lim_out, lim_out),
        "bu": jax.random.uniform(kub, (k,), jnp.float32, -lim_out, lim_out),
    }


def prepare_params(params, *, k, compute_dtype):
    """One-time (per dtype) fusion: [Wq*scale | Wk | Wv], pre-cast weights."""
    scale = 1.0 / math.sqrt(k)
    w_qkv = jnp.concatenate(
        [params["wq"] * scale, params["wk"], params["wv"]], axis=1)
    return {
        "w_qkv": w_qkv.astype(compute_dtype),      # (k, 3*h*k)
        "wu": params["wu"].astype(compute_dtype),  # (h*k, k)
        "bu": params["bu"].astype(jnp.float32),    # (k,)  bias kept f32
    }


def multi_head_attention(prep, x, heads, compute_dtype=jnp.bfloat16):
    b, t, k = x.shape
    h = heads
    hk = h * k

    # Cast the activation ONCE in the wrapper (halves HBM->VMEM traffic of the
    # grid-re-read operands; no per-tile VPU casts inside the kernels).
    x2d = x.reshape(b * t, k).astype(compute_dtype)

    # Fused Q/K/V projection: one streamed read of x2d, lane-dense output.
    qkv2d = pallas_linear(x2d, prep["w_qkv"], out_dtype=compute_dtype)  # (b*t, 3hk)

    # Wrapper-side layout plumbing: (b*t, 3*h*k) -> (3, b*h, t, k) so the
    # attention BlockSpecs address per-(batch,head) tiles directly via DMA.
    qkv5 = (qkv2d.reshape(b, t, 3, h, k)
            .transpose(2, 0, 3, 1, 4)
            .reshape(3, b * h, t, k))

    y = pallas_flash_attention(qkv5, compute_dtype=compute_dtype)       # (b*h, t, k)

    # Back to (b*t, h*k) for the unify projection.
    y2d = (y.reshape(b, h, t, k).transpose(0, 2, 1, 3).reshape(b * t, hk))

    out = pallas_linear(y2d, prep["wu"], prep["bu"], out_dtype=jnp.float32)
    return out.reshape(b, t, k)


def reference_forward(params, x, heads):
    """Pure-JAX f32 reference mirroring the PyTorch forward."""
    b, t, k = x.shape
    h = heads
    x2d = x.reshape(b * t, k)
    q = (x2d @ params["wq"]).reshape(b, t, h, k).transpose(0, 2, 1, 3).reshape(b * h, t, k)
    kk = (x2d @ params["wk"]).reshape(b, t, h, k).transpose(0, 2, 1, 3).reshape(b * h, t, k)
    v = (x2d @ params["wv"]).reshape(b, t, h, k).transpose(0, 2, 1, 3).reshape(b * h, t, k)
    w_prime = jnp.einsum("bqd,bkd->bqk", q, kk) / math.sqrt(k)
    w = jax.nn.softmax(w_prime, axis=2)
    y = jnp.einsum("bqk,bkd->bqd", w, v).reshape(b, h, t, k)
    y = y.transpose(0, 2, 1, 3).reshape(b * t, h * k)
    return (y @ params["wu"] + params["bu"]).reshape(b, t, k)


# ---------------------------------------------------------------------------

if __name__ == "__main__":
    key = jax.random.PRNGKey(0)
    k_param, k_x = jax.random.split(key)

    B, T, K, HEADS = 2, 8, 32, 4
    params = init_params(k_param, K, HEADS)
    x = jax.random.normal(k_x, (B, T, K), dtype=jnp.float32)

    ref = reference_forward(params, x, HEADS)

    # f32 compute path: strict structural/numerical check (exact reciprocal).
    prep_f32 = prepare_params(params, k=K, compute_dtype=jnp.float32)
    out_f32 = jax.block_until_ready(
        multi_head_attention(prep_f32, x, HEADS, compute_dtype=jnp.float32))
    assert out_f32.shape == (B, T, K)
    assert jnp.allclose(out_f32, ref, atol=5e-3, rtol=5e-3), "f32 path mismatch"

    # bf16 MXU-input path (default, performance): looser tolerance.
    prep_bf16 = prepare_params(params, k=K, compute_dtype=jnp.bfloat16)
    out_bf16 = jax.block_until_ready(
        multi_head_attention(prep_bf16, x, HEADS, compute_dtype=jnp.bfloat16))
    assert out_bf16.shape == (B, T, K)
    assert jnp.allclose(out_bf16, ref, atol=5e-2, rtol=5e-2), "bf16 path mismatch"

    print("KERNEL_OK")
</pallas_src>

<mosaic_0001>
module attributes {stable_mosaic.version = 11 : i64} {
  func.func @_matmul_kernel(%arg0: i32, %arg1: i32, %arg2: i32, %arg3: memref<16x32xf32, #tpu.memory_space<vmem>>, %arg4: memref<32x128xf32, #tpu.memory_space<vmem>>, %arg5: memref<16x128xf32, #tpu.memory_space<vmem>>, %arg6: memref<16x128xf32, #tpu.memory_space<vmem>>) attributes {dimension_semantics = [#tpu.dimension_semantics<parallel>, #tpu.dimension_semantics<parallel>, #tpu.dimension_semantics<arbitrary>], iteration_bounds = array<i64: 1, 3, 1>, scalar_prefetch = 0 : i64, scratch_operands = 1 : i64, tpu.core_type = #tpu.core_type<tc>, window_params = [{transform_indices = @transform_0, window_bounds = array<i64: 16, 32>}, {transform_indices = @transform_1, window_bounds = array<i64: 32, 128>}, {transform_indices = @transform_2, window_bounds = array<i64: 16, 128>}]} {
    %c0_i32 = arith.constant 0 : i32
    %0 = arith.cmpi eq, %arg2, %c0_i32 : i32
    %1 = arith.extui %0 : i1 to i32
    %c0_i32_0 = arith.constant 0 : i32
    %2 = arith.cmpi ne, %1, %c0_i32_0 : i32
    scf.if %2 {
      %cst_10 = arith.constant 0.000000e+00 : f32
      %12 = vector.broadcast %cst_10 : f32 to vector<16x128xf32>
      %c0_11 = arith.constant 0 : index
      %c0_12 = arith.constant 0 : index
      %13 = vector.load %arg6[%c0_11, %c0_12] : memref<16x128xf32, #tpu.memory_space<vmem>>, vector<16x128xf32>
      tpu.vector_store %arg6[%c0_11, %c0_12], %12 {strides = array<i32>} : memref<16x128xf32, #tpu.memory_space<vmem>>, vector<16x128xf32>,
    } else {
    }
    %c0 = arith.constant 0 : index
    %c0_1 = arith.constant 0 : index
    %3 = vector.load %arg6[%c0, %c0_1] : memref<16x128xf32, #tpu.memory_space<vmem>>, vector<16x128xf32>
    %c0_2 = arith.constant 0 : index
    %c0_3 = arith.constant 0 : index
    %4 = vector.load %arg3[%c0_2, %c0_3] : memref<16x32xf32, #tpu.memory_space<vmem>>, vector<16x32xf32>
    %c0_4 = arith.constant 0 : index
    %c0_5 = arith.constant 0 : index
    %5 = vector.load %arg4[%c0_4, %c0_5] : memref<32x128xf32, #tpu.memory_space<vmem>>, vector<32x128xf32>
    %cst = arith.constant dense<0.000000e+00> : vector<16x128xf32>
    %6 = tpu.matmul %4, %5, %cst {dimension_numbers = #tpu.dot_dimension_numbers<[1], [0], [0], [1], [0, 0, 1, 1], [], []>} : vector<16x32xf32>, vector<32x128xf32>, vector<16x128xf32> -> vector<16x128xf32>
    %7 = arith.addf %3, %6 : vector<16x128xf32>
    %c0_6 = arith.constant 0 : index
    %c0_7 = arith.constant 0 : index
    %8 = vector.load %arg6[%c0_6, %c0_7] : memref<16x128xf32, #tpu.memory_space<vmem>>, vector<16x128xf32>
    tpu.vector_store %arg6[%c0_6, %c0_7], %7 {strides = array<i32>} : memref<16x128xf32, #tpu.memory_space<vmem>>, vector<16x128xf32>,
    %c0_i32_8 = arith.constant 0 : i32
    %9 = arith.cmpi eq, %arg2, %c0_i32_8 : i32
    %10 = arith.extui %9 : i1 to i32
    %c0_i32_9 = arith.constant 0 : i32
    %11 = arith.cmpi ne, %10, %c0_i32_9 : i32
    scf.if %11 {
      %c0_10 = arith.constant 0 : index
      %c0_11 = arith.constant 0 : index
      %12 = vector.load %arg6[%c0_10, %c0_11] : memref<16x128xf32, #tpu.memory_space<vmem>>, vector<16x128xf32>
      %c0_12 = arith.constant 0 : index
      %c0_13 = arith.constant 0 : index
      %13 = vector.load %arg5[%c0_12, %c0_13] : memref<16x128xf32, #tpu.memory_space<vmem>>, vector<16x128xf32>
      tpu.vector_store %arg5[%c0_12, %c0_13], %12 {strides = array<i32>} : memref<16x128xf32, #tpu.memory_space<vmem>>, vector<16x128xf32>,
    } else {
    }
    return
  }
  func.func @transform_0(%arg0: i32, %arg1: i32, %arg2: i32) -> (i32, i32) {
    %c0_i32 = arith.constant 0 : i32
    return %arg0, %arg2 : i32, i32
  }
  func.func @transform_1(%arg0: i32, %arg1: i32, %arg2: i32) -> (i32, i32) {
    %c0_i32 = arith.constant 0 : i32
    return %arg2, %arg1 : i32, i32
  }
  func.func @transform_2(%arg0: i32, %arg1: i32, %arg2: i32) -> (i32, i32) {
    %c0_i32 = arith.constant 0 : i32
    return %arg0, %arg1 : i32, i32
  }
}

</mosaic_0001>

<llo_original>
// kernel: tpu_custom_call.1
$region0: #{tpu_custom_call.1}
  #allocation0 [shape = 'u32[]', space=smem, size = 0x4, offset = 0x4, fixed_abs, tag = 'smem constant byte address 0x4 - core index']
  #allocation1 [shape = 'u32[144,128]{1,0:T(1,128)}', space=vmem, size = 0x12000, scoped, tag = 'internal scratch']
  #allocation2 [shape = 'f32[16,128]{1,0:T(8,128)}', space=vmem, size = 0x2000, scoped, tag = 'scratch operand']
  %s0 = inlined_call_operand.hbm [shape: f32[16,32], index: 0, kind: input, shape index: {}]
  %s1 = inlined_call_operand.hbm [shape: f32[32,384], index: 1, kind: input, shape index: {}]
  %s2 = inlined_call_operand.hbm [shape: f32[16,384], index: 2, kind: output, shape index: {}]
  %s3 = sld [smem:[#allocation0]]
  $region57: #{tpu_custom_call.1} parent=0
    _
  %s5 = ssub.s32 1, %s3
  %s6 = scalar_select 0, %s5, %s3
  $region1: #{tpu_custom_call.1} parent=0
    #allocation3 [shape = 'u8[8192]{0}', space=vmem, size = 0x2000, scoped, tag = 'input window, operand 0, single buffered']
    #allocation4 [shape = 's32[2]{0}', space=sflag, size = 0x8, scoped, tag = 'scoped memory for tpu_custom_call.1']
    #allocation5 [shape = 's32[2]{0}', space=sflag, size = 0x8, scoped, tag = 'scoped memory for tpu_custom_call.1']
    #allocation6 [shape = 'u8[32768]{0}', space=vmem, size = 0x8000, scoped, tag = 'input window, operand 1']
    #allocation7 [shape = 's32[2]{0}', space=sflag, size = 0x8, scoped, tag = 'scoped memory for tpu_custom_call.1']
    #allocation8 [shape = 'u8[16384]{0}', space=vmem, size = 0x4000, scoped, tag = 'output window, operand 0']
    %7 = vsyncpa [#allocation4], 0
    %8 = vsyncpa [#allocation7], 0
    %s9 = scalar_lea.sflag [#allocation7], 1
    %10 = vsyncpa %s9, 0
    %11 = vsyncpa [#allocation5], 0
    %s12 = scalar_lea.sflag [#allocation5], 1
    %13 = vsyncpa %s12, 0
    loop: start=0, step=1, limit=5
    $region2: #{tpu_custom_call.1} parent=1 // loop_pre_header
      _
    $region3: #{tpu_custom_call.1} parent=1 // loop_header
      %s15 = sphi 0, %s19
      %p16 = scmp.ge.s32.totalorder %s15, 5
      %s22 = sphi 0, %s41
      %s23 = sphi 0, %s37
      %s24 = sphi 0, %s33
      %s25 = sphi 0, %s22
      %s26 = sphi 0, %s23
      %s27 = sphi 0, %s24
      %s28 = sphi 0, %s25
      %s29 = sphi 0, %s26
      %s30 = sphi 0, %s27
      %s46 = sphi 0, %s48
      %s49 = sphi 0, %s46
      %s50 = sphi 0, %s49
      %s66 = sphi 0, %s50
      %s74 = sphi 0, %s76
      %s77 = sphi 0, %s74
      %s78 = sphi 0, %s77
      %s94 = sphi 0, %s78
      %s102 = sphi 0, %s104
      %s105 = sphi 0, %s102
      %s106 = sphi 0, %s105
      %s122 = sphi 0, %s106
    $region4: #{tpu_custom_call.1} parent=1 // loop_header_branch
      %18 = sbr.rel (%p16) target = $region8
    $region5: #{tpu_custom_call.1} parent=1 // loop_body
      %s20 = ssub.s32 %s15, 1
      %s21 = ssub.s32 %s15, 2
      %s31 = sadd.s32 1, %s24
      %p32 = scmp.ge.s32.totalorder %s31, 1
      %s33 = scalar_select %p32, 0, %s31
      %s34 = sadd.s32 1, %s23
      %s35 = scalar_select %p32, %s34, %s23
      %p36 = scmp.ge.s32.totalorder %s35, 3
      %s37 = scalar_select %p36, 0, %s35
      %s38 = sadd.s32 1, %s22
      %s39 = scalar_select %p36, %s38, %s22
      %p40 = scmp.ge.s32.totalorder %s39, 1
      %s41 = scalar_select %p40, 0, %s39
      %s42 = ssub.s32 %s22, %s41
      %s43 = ssub.s32 %s24, %s33
      %s44 = sor.u32 %s42, %s43
      %p45 = scmp.eq.s32.totalorder %s44, 0
      %s47 = sadd.s32 %s46, 1
      %s48 = scalar_select %p45, %s46, %s47
      %p51 = pneg %p45
      %p52 = scmp.eq.s32.totalorder %s15, 2
      %p53 = por %p51, %p52
      %p54 = scmp.ne.s32.totalorder %s46, %s49
      %p55 = scmp.eq.s32.totalorder %s15, 0
      %p56 = por %p54, %p55
      %p57 = scmp.ne.s32.totalorder %s46, %s49
      %p58 = scmp.eq.s32.totalorder %s20, 2
      %p59 = por %p57, %p58
      %p60 = scmp.ne.s32.totalorder %s49, %s50
      %p61 = scmp.eq.s32.totalorder %s20, 0
      %p62 = por %p60, %p61
      %p63 = scmp.ne.s32.totalorder %s49, %s50
      %p64 = scmp.eq.s32.totalorder %s21, 2
      %p65 = por %p63, %p64
      %p67 = scmp.ne.s32.totalorder %s50, %s66
      %p68 = scmp.eq.s32.totalorder %s21, 0
      %p69 = por %p67, %p68
      %s70 = ssub.s32 %s24, %s33
      %s71 = ssub.s32 %s23, %s37
      %s72 = sor.u32 %s70, %s71
      %p73 = scmp.eq.s32.totalorder %s72, 0
      %s75 = sadd.s32 %s74, 1
      %s76 = scalar_select %p73, %s74, %s75
      %p79 = pneg %p73
      %p80 = scmp.eq.s32.totalorder %s15, 2
      %p81 = por %p79, %p80
      %p82 = scmp.ne.s32.totalorder %s74, %s77
      %p83 = scmp.eq.s32.totalorder %s15, 0
      %p84 = por %p82, %p83
      %p85 = scmp.ne.s32.totalorder %s74, %s77
      %p86 = scmp.eq.s32.totalorder %s20, 2
      %p87 = por %p85, %p86
      %p88 = scmp.ne.s32.totalorder %s77, %s78
      %p89 = scmp.eq.s32.totalorder %s20, 0
      %p90 = por %p88, %p89
      %p91 = scmp.ne.s32.totalorder %s77, %s78
      %p92 = scmp.eq.s32.totalorder %s21, 2
      %p93 = por %p91, %p92
      %p95 = scmp.ne.s32.totalorder %s78, %s94
      %p96 = scmp.eq.s32.totalorder %s21, 0
      %p97 = por %p95, %p96
      %s98 = ssub.s32 %s22, %s41
      %s99 = ssub.s32 %s23, %s37
      %s100 = sor.u32 %s98, %s99
      %p101 = scmp.eq.s32.totalorder %s100, 0
      %s103 = sadd.s32 %s102, 1
      %s104 = scalar_select %p101, %s102, %s103
      %p107 = pneg %p101
      %p108 = scmp.eq.s32.totalorder %s15, 2
      %p109 = por %p107, %p108
      %p110 = scmp.ne.s32.totalorder %s102, %s105
      %p111 = scmp.eq.s32.totalorder %s15, 0
      %p112 = por %p110, %p111
      %p113 = scmp.ne.s32.totalorder %s102, %s105
      %p114 = scmp.eq.s32.totalorder %s20, 2
      %p115 = por %p113, %p114
      %p116 = scmp.ne.s32.totalorder %s105, %s106
      %p117 = scmp.eq.s32.totalorder %s20, 0
      %p118 = por %p116, %p117
      %p119 = scmp.ne.s32.totalorder %s105, %s106
      %p120 = scmp.eq.s32.totalorder %s21, 2
      %p121 = por %p119, %p120
      %p123 = scmp.ne.s32.totalorder %s106, %s122
      %p124 = scmp.eq.s32.totalorder %s21, 0
      %p125 = por %p123, %p124
      %p126 = scmp.le.s32.totalorder 1, %s15
      %p127 = scmp.lt.s32.totalorder %s15, 4
      %p128 = pnand %p126, %p127
      %p129 = pneg %p128
      // Predicated region
      $region9: #{tpu_custom_call.1} parent=5 // pred_check
        _
      $region10: #{tpu_custom_call.1} parent=5 // pred_check_branch
        %131 = sbr.rel (%p128) target = $region12
      $region11: #{tpu_custom_call.1} parent=5 // pred_region
        %s132 = ssub.s32 %s15, 1
        // Predicated region
        $region13: #{tpu_custom_call.1} parent=11 // pred_check
          %p133 = pneg %p62
        $region14: #{tpu_custom_call.1} parent=11 // pred_check_branch
          %135 = sbr.rel (%p133) target = $region16
        $region15: #{tpu_custom_call.1} parent=11 // pred_region
          %s136 = smul.u32 2, %s25
          %s138 = ssub.s32 256, 256
          %139 = vsyncadd [#allocation4], %s138
          %s140 = sadd.s32 %s27, %s136
          %s141 = smul.addr %s140, 128
          %s142 = scalar_lea.hbm %s0, %s141
          %s143 = sshll.u32 [#allocation3], 4
          %s144 = int_to_ptr.vmem [resolvable:$true] %s143
          %149 = dma.hbm_to_vmem [thread:$0]  %s142, 256, %s144, [#allocation4], 128, 128, 8
        $region16: #{tpu_custom_call.1} parent=11 // pred_fallthru
          _
      $region12: #{tpu_custom_call.1} parent=5 // pred_fallthru
        _
      %p150 = scmp.lt.s32.totalorder %s15, 3
      // Predicated region
      $region17: #{tpu_custom_call.1} parent=5 // pred_check
        %p151 = pneg %p150
      $region18: #{tpu_custom_call.1} parent=5 // pred_check_branch
        %153 = sbr.rel (%p151) target = $region20
      $region19: #{tpu_custom_call.1} parent=5 // pred_region
        // Predicated region
        $region21: #{tpu_custom_call.1} parent=19 // pred_check
          %p154 = pneg %p84
        $region22: #{tpu_custom_call.1} parent=19 // pred_check_branch
          %156 = sbr.rel (%p154) target = $region24
        $region23: #{tpu_custom_call.1} parent=19 // pred_region
          %s157 = sand.u32 %s74, 1
          %s158 = scalar_lea.sflag [#allocation7], %s157
          %s159 = sand.u32 %s74, 1
          %s160 = smul.addr %s159, 32
          %s161 = scalar_lea.vmem [#allocation6], %s160
          %s162 = smul.u32 4, %s24
          %s164 = ssub.s32 512, 512
          %165 = vsyncadd %s158, %s164
          %s166 = smul.addr %s162, 3
          %s167 = sadd.s32 %s23, %s166
          %s168 = smul.addr %s167, 128
          %s169 = scalar_lea.hbm %s1, %s168
          %s170 = sshll.u32 %s161, 4
          %s171 = int_to_ptr.vmem [resolvable:$true] %s170
          %176 = dma.hbm_to_vmem [thread:$0]  %s169, 512, %s171, %s158, 384, 128, 8
        $region24: #{tpu_custom_call.1} parent=19 // pred_fallthru
          _
      $region20: #{tpu_custom_call.1} parent=5 // pred_fallthru
        _
      %p177 = scmp.le.s32.totalorder 1, %s15
      %p178 = scmp.lt.s32.totalorder %s15, 4
      %p179 = pnand %p177, %p178
      %p180 = pneg %p179
      // Predicated region
      $region25: #{tpu_custom_call.1} parent=5 // pred_check
        _
      $region26: #{tpu_custom_call.1} parent=5 // pred_check_branch
        %182 = sbr.rel (%p179) target = $region28
      $region27: #{tpu_custom_call.1} parent=5 // pred_region
        %s183 = ssub.s32 %s15, 1
        // Predicated region
        $region29: #{tpu_custom_call.1} parent=27 // pred_check
          %p184 = pneg %p62
        $region30: #{tpu_custom_call.1} parent=27 // pred_check_branch
          %186 = sbr.rel (%p184) target = $region32
        $region31: #{tpu_custom_call.1} parent=27 // pred_region
          %187 = dma.done [#allocation4], 256
        $region32: #{tpu_custom_call.1} parent=27 // pred_fallthru
          _
        %s188 = sand.u32 %s77, 1
        %s189 = scalar_lea.sflag [#allocation7], %s188
        %s190 = sand.u32 %s77, 1
        %s191 = smul.addr %s190, 32
        %s192 = scalar_lea.vmem [#allocation6], %s191
        // Predicated region
        $region33: #{tpu_custom_call.1} parent=27 // pred_check
          %p193 = pneg %p90
        $region34: #{tpu_custom_call.1} parent=27 // pred_check_branch
          %195 = sbr.rel (%p193) target = $region36
        $region35: #{tpu_custom_call.1} parent=27 // pred_region
          %196 = dma.done %s189, 512
        $region36: #{tpu_custom_call.1} parent=27 // pred_fallthru
          _
        %p197 = pneg %p62
        %p198 = pneg %p59
        %s199 = sand.u32 %s77, 1
        %s200 = scalar_lea.sflag [#allocation7], %s199
        %s201 = sand.u32 %s77, 1
        %s202 = smul.addr %s201, 32
        %s203 = scalar_lea.vmem [#allocation6], %s202
        %p204 = pneg %p90
        %p205 = pneg %p87
        %p206 = pneg %p118
        %p207 = pneg %p115
        %s208 = sand.u32 %s105, 1
        %s209 = scalar_lea.sflag [#allocation5], %s208
        %s210 = sand.u32 %s105, 1
        %s211 = smul.addr %s210, 16
        %s212 = scalar_lea.vmem [#allocation8], %s211
        %s213 = smul.u32 2, %s25
        %s214 = smul.u32 4, %s27
        %s215 = smul.u32 2, %s25
        %p216 = scmp.eq.s32.totalorder %s27, 0
        // Predicated region
        $region37: #{tpu_custom_call.1} parent=27 // pred_check
          %p217 = pneg %p216
        $region38: #{tpu_custom_call.1} parent=27 // pred_check_branch
          %219 = sbr.rel (%p217) target = $region40
        $region39: #{tpu_custom_call.1} parent=27 // pred_region
          %220 = vst [vmem:[#allocation2] sm:$0xff] 0.0
          %221 = vst [vmem:[#allocation2 + $0x8] sm:$0xff] 0.0
        $region40: #{tpu_custom_call.1} parent=27 // pred_fallthru
          _
        %v222 = vld [vmem:[#allocation2] sm:$0xff]
        %v223 = vld [vmem:[#allocation2 + $0x8] sm:$0xff]
        %v224 = vld [vmem:[#allocation3] sm:$0xff]
        %v225 = vld [vmem:[#allocation3 + $0x8] sm:$0xff]
        %v226 = vld [vmem:[%s192] sm:$0xff]
        %v227 = vld [vmem:[%s192 + $0x8] sm:$0xff]
        %v228 = vld [vmem:[%s192 + $0x10] sm:$0xff]
        %v229 = vld [vmem:[%s192 + $0x18] sm:$0xff]
        %vm230 = vcmask 261120
        %v232 = vsel %vm230, %v224, 0
        %v235 = vsel %vm230, %v225, 0
        %237 = vmatprep.subr.mxu0 0.0
        %238 = vmatpush1.msra.mxu0 0.0
        %239 = vmatprep.subr.mxu0 0.0
        %240 = vmatpush1.msra.mxu0 0.0
        %241 = vmatprep.subr.mxu0 0.0
        %242 = vmatpush1.msra.mxu0 0.0
        %243 = vmatprep.subr.mxu0 0.0
        %244 = vmatpush1.msra.mxu0 0.0
        %245 = vmatprep.subr.mxu0 0.0
        %246 = vmatpush1.msra.mxu0 0.0
        %247 = vmatprep.subr.mxu0 0.0
        %248 = vmatpush1.msra.mxu0 0.0
        %249 = vmatprep.subr.mxu0 0.0
        %250 = vmatpush1.msra.mxu0 0.0
        %251 = vmatprep.subr.mxu0 0.0
        %252 = vmatpush1.msra.mxu0 0.0
        %253 = vmatprep.subr.mxu0 0.0
        %254 = vmatpush1.msra.mxu0 0.0
        %255 = vmatprep.subr.mxu0 0.0
        %256 = vmatpush1.msra.mxu0 0.0
        %257 = vmatprep.subr.mxu0 0.0
        %258 = vmatpush1.msra.mxu0 0.0
        %259 = vmatprep.subr.mxu0 0.0
        %260 = vmatpush1.msra.mxu0 0.0
        %261 = vmatprep.subr.mxu0 0.0
        %262 = vmatpush1.msra.mxu0 %v229
        %263 = vmatprep.subr.mxu0 0.0
        %264 = vmatpush1.msra.mxu0 %v228
        %265 = vmatprep.subr.mxu0 0.0
        %266 = vmatpush1.msra.mxu0 %v227
        %267 = vmatprep.subr.mxu0 0.0
        %268 = vmatpush1.msra.mxu0 %v226
        %269 = vmatprep.subr.mxu0 0.0
        %270 = vmatpush2.msra.mxu0 0.0
        %271 = vmatprep.subr.mxu0 0.0
        %272 = vmatpush2.msra.mxu0 0.0
        %273 = vmatprep.subr.mxu0 0.0
        %274 = vmatpush2.msra.mxu0 0.0
        %275 = vmatprep.subr.mxu0 0.0
        %276 = vmatpush2.msra.mxu0 0.0
        %277 = vmatprep.subr.mxu0 0.0
        %278 = vmatpush2.msra.mxu0 0.0
        %279 = vmatprep.subr.mxu0 0.0
        %280 = vmatpush2.msra.mxu0 0.0
        %281 = vmatprep.subr.mxu0 0.0
        %282 = vmatpush2.msra.mxu0 0.0
        %283 = vmatprep.subr.mxu0 0.0
        %284 = vmatpush2.msra.mxu0 0.0
        %285 = vmatprep.subr.mxu0 0.0
        %286 = vmatpush2.msra.mxu0 0.0
        %287 = vmatprep.subr.mxu0 0.0
        %288 = vmatpush2.msra.mxu0 0.0
        %289 = vmatprep.subr.mxu0 0.0
        %290 = vmatpush2.msra.mxu0 0.0
        %291 = vmatprep.subr.mxu0 0.0
        %292 = vmatpush2.msra.mxu0 0.0
        %293 = vmatprep.subr.mxu0 0.0
        %294 = vmatpush2.msra.mxu0 0.0
        %295 = vmatprep.subr.mxu0 0.0
        %296 = vmatpush2.msra.mxu0 0.0
        %297 = vmatprep.subr.mxu0 0.0
        %298 = vmatpush2.msra.mxu0 0.0
        %299 = vmatprep.subr.mxu0 0.0
        %300 = vmatpush2.msra.mxu0 0.0
        %301 = vmatprep.mubr.f32.mxu0 0.0
        %302 = vmatmul.mubr.f32.gmra.mxu0 %v232
        %v303 = vpop.f32.mrf.mxu0
        %v304 = vadd.f32 0.0, %v303
        %v305 = vpop.f32.mrf.mxu0
        %306 = vmatprep.mubr.f32.mxu0 0.0
        %307 = vmatmul.mubr.f32.gmra.mxu0 %v235
        %v308 = vpop.f32.mrf.mxu0
        %v309 = vadd.f32 0.0, %v308
        %v310 = vpop.f32.mrf.mxu0
        %311 = vdwg.mxu0
        %v312 = vadd.f32 %v222, %v304
        %v313 = vadd.f32 %v223, %v309
        %314 = vst [vmem:[#allocation2] sm:$0xff] %v312
        %315 = vst [vmem:[#allocation2 + $0x8] sm:$0xff] %v313
        // Predicated region
        $region41: #{tpu_custom_call.1} parent=27 // pred_check
          %p316 = pneg %p216
        $region42: #{tpu_custom_call.1} parent=27 // pred_check_branch
          %318 = sbr.rel (%p316) target = $region44
        $region43: #{tpu_custom_call.1} parent=27 // pred_region
          %v319 = vld [vmem:[#allocation2] sm:$0xff]
          %v320 = vld [vmem:[#allocation2 + $0x8] sm:$0xff]
          %321 = vst [vmem:[%s212] sm:$0xff] %v319
          %322 = vst [vmem:[%s212 + $0x8] sm:$0xff] %v320
        $region44: #{tpu_custom_call.1} parent=27 // pred_fallthru
          _
        %s323 = sand.u32 %s105, 1
        %s324 = scalar_lea.sflag [#allocation5], %s323
        %s325 = sand.u32 %s105, 1
        %s326 = smul.addr %s325, 16
        %s327 = scalar_lea.vmem [#allocation8], %s326
        // Predicated region
        $region45: #{tpu_custom_call.1} parent=27 // pred_check
          %p328 = pneg %p115
        $region46: #{tpu_custom_call.1} parent=27 // pred_check_branch
          %330 = sbr.rel (%p328) target = $region48
        $region47: #{tpu_custom_call.1} parent=27 // pred_region
          %s331 = smul.u32 2, %s25
          %s333 = ssub.s32 256, 256
          %334 = vsyncadd %s324, %s333
          %s335 = smul.addr %s331, 3
          %s336 = sadd.s32 %s26, %s335
          %s337 = smul.addr %s336, 128
          %s338 = scalar_lea.hbm %s2, %s337
          %s339 = sshll.u32 %s327, 4
          %s340 = int_to_ptr.vmem [resolvable:$true] %s339
          %345 = dma.vmem_to_hbm [thread:$0]  %s340, 256, %s338, %s324, 128, 384, 8
        $region48: #{tpu_custom_call.1} parent=27 // pred_fallthru
          _
      $region28: #{tpu_custom_call.1} parent=5 // pred_fallthru
        _
      %p346 = scmp.le.s32.totalorder 2, %s15
      // Predicated region
      $region49: #{tpu_custom_call.1} parent=5 // pred_check
        %p347 = pneg %p346
      $region50: #{tpu_custom_call.1} parent=5 // pred_check_branch
        %349 = sbr.rel (%p347) target = $region52
      $region51: #{tpu_custom_call.1} parent=5 // pred_region
        %s350 = ssub.s32 %s15, 2
        // Predicated region
        $region53: #{tpu_custom_call.1} parent=51 // pred_check
          %p351 = pneg %p121
        $region54: #{tpu_custom_call.1} parent=51 // pred_check_branch
          %353 = sbr.rel (%p351) target = $region56
        $region55: #{tpu_custom_call.1} parent=51 // pred_region
          %s354 = sand.u32 %s106, 1
          %s355 = scalar_lea.sflag [#allocation5], %s354
          %s356 = sand.u32 %s106, 1
          %s357 = smul.addr %s356, 16
          %s358 = scalar_lea.vmem [#allocation8], %s357
          %359 = dma.done %s355, 256
        $region56: #{tpu_custom_call.1} parent=51 // pred_fallthru
          _
      $region52: #{tpu_custom_call.1} parent=5 // pred_fallthru
        _
    $region6: #{tpu_custom_call.1} parent=1 // loop_footer
      %s19 = sadd.s32 1, %s15
    $region7: #{tpu_custom_call.1} parent=1 // loop_footer_branch
      %14 = sbr.rel target = $region3
    $region8: #{tpu_custom_call.1} parent=1 // loop_exit
      _
    %360 = vsyncpa [#allocation4], 1
    %s361 = scalar_lea.sflag [#allocation4], 1
    %362 = vsyncpa %s361, 1
    %363 = vsyncpa [#allocation7], 1
    %s364 = scalar_lea.sflag [#allocation7], 1
    %365 = vsyncpa %s364, 1
    %366 = vsyncpa [#allocation5], 1
    %s367 = scalar_lea.sflag [#allocation5], 1
    %368 = vsyncpa %s367, 1

</llo_original>
